<compile_context>
chip_gen: v6e
topology: v6e:2x2x1
jax: 0.10.0
libtpu: 0.0.40
codegen_flags: <defaults>
</compile_context>

<pallas_src>
import math

import jax
import jax.numpy as jnp
from jax import lax
from jax.experimental import pallas as pl
from jax.experimental.pallas import tpu as pltpu

INIT_SIGMA = 0.017
PARAM_DTYPE = jnp.bfloat16       # HBM storage dtype for weights / sigmas / biases
MXU_DTYPE = jnp.bfloat16         # matmul input dtype (f32 accumulation)

# Trace-time backend dispatch: on-chip PRNG only lowers for real TPU.
ON_TPU = jax.default_backend() == "tpu"


# ---------------------------------------------------------------------------
# Small trace-time dispatch helpers (TPU-specific primitives vs portable ops).
# ---------------------------------------------------------------------------
def _bitcast(x, dtype):
    if ON_TPU:
        return pltpu.bitcast(x, dtype)
    return lax.bitcast_convert_type(x, dtype)


def _recip(x):
    # approx=True -> EUP vrcp (separate issue slot, essentially free) on TPU.
    if ON_TPU:
        return pl.reciprocal(x, approx=True)
    return 1.0 / x


# ---------------------------------------------------------------------------
# Random bits -> approx standard normal (shared by TPU-PRNG and bits-in paths).
# ---------------------------------------------------------------------------
def _std_normal_from_bits(bits):
    """uint32 bits -> approx N(0,1), f32.

    Single-branch Abramowitz–Stegun 26.2.23 inverse normal CDF:
    1 log + 1 sqrt + 1 (approx) reciprocal per element, |err| < 4.5e-4 —
    irrelevant next to sigma = 0.017 exploration noise.
    """
    if bits.dtype != jnp.uint32:
        bits = _bitcast(bits, jnp.uint32)
    # 23 mantissa bits -> float in [1, 2) -> uniform u in [0, 1).
    fbits = _bitcast((bits & jnp.uint32(0x007FFFFF)) | jnp.uint32(0x3F800000),
                     jnp.float32)
    u = fbits - 1.0
    p = jnp.maximum(jnp.minimum(u, 1.0 - u), 1e-9)      # tail prob in (0, 0.5]
    t = jnp.sqrt(-2.0 * jnp.log(p))
    num = 2.515517 + t * (0.802853 + t * 0.010328)
    den = 1.0 + t * (1.432788 + t * (0.189269 + t * 0.001308))
    z = t - num * _recip(den)
    return jnp.where(u < 0.5, -z, z)


# ---------------------------------------------------------------------------
# Shared in-kernel compute.
# ---------------------------------------------------------------------------
def _noisy_wb(w_ref, sw_ref, b_ref, sb_ref, eps):
    """W_eff = W + sigma_W*eps, b_eff = b + sigma_b*eps; eps rows = [W rows ; bias row]."""
    n_in = w_ref.shape[0]
    w = w_ref[...].astype(jnp.float32) + sw_ref[...].astype(jnp.float32) * eps[:n_in, :]
    b = b_ref[...].astype(jnp.float32) + sb_ref[...].astype(jnp.float32) * eps[n_in:n_in + 1, :]
    return w, b


def _qnet_compute(x_ref, q_ref, w0, b0, w1, b1, w2, b2):
    """Fused 3-matmul dueling forward.  bf16 MXU inputs, f32 accumulation."""
    mx = lambda a: a.astype(MXU_DTYPE)
    x = x_ref[...]
    # fc0 + ReLU
    h0 = jnp.maximum(
        jnp.dot(mx(x), mx(w0), preferred_element_type=jnp.float32) + b0, 0.0)
    # fused fc1_s | fc1_a + ReLU -> h1 = [hs | ha]  (B, 256)
    h1 = jnp.maximum(
        jnp.dot(mx(h0), mx(w1), preferred_element_type=jnp.float32) + b1, 0.0)
    # fused block-diagonal fc2_s / fc2_a -> head = [V | A_1..A_A]  (B, 1+A)
    head = jnp.dot(mx(h1), mx(w2), preferred_element_type=jnp.float32) + b2
    v = head[:, 0:1]
    adv = head[:, 1:]
    # dueling combine: q = V + A - mean_a(A)
    q_ref[...] = v + adv - jnp.mean(adv, axis=1, keepdims=True)


# ---------------------------------------------------------------------------
# Kernels (statically specialized).
# ---------------------------------------------------------------------------
def _qnet_kernel_clean(x_ref, w0_ref, b0_ref, w1_ref, b1_ref, w2_ref, b2_ref, q_ref):
    # noise=False path: no PRNG / eps code at all.
    f32 = lambda r: r[...].astype(jnp.float32)
    _qnet_compute(x_ref, q_ref,
                  w0_ref[...], f32(b0_ref),
                  w1_ref[...], f32(b1_ref),
                  w2_ref[...], f32(b2_ref))


def _qnet_kernel_noisy_prng(seed_ref, x_ref,
                            w0_ref, sw0_ref, b0_ref, sb0_ref,
                            w1_ref, sw1_ref, b1_ref, sb1_ref,
                            w2_ref, sw2_ref, b2_ref, sb2_ref,
                            q_ref):
    """TPU path: eps generated on-chip; weights/sigmas are the only HBM reads."""
    pltpu.prng_seed(seed_ref[0])

    def draw_eps(w_ref):
        rows = w_ref.shape[0] + 1            # weight rows + one bias row
        cols = w_ref.shape[1]
        # Draw on a (8,128)-aligned shape (same vreg count -> no extra EUP work)
        # so prng_random_bits always sees a friendly layout, then slice.
        r_pad = ((rows + 7) // 8) * 8
        c_pad = max(((cols + 127) // 128) * 128, 128)
        eps = _std_normal_from_bits(pltpu.prng_random_bits((r_pad, c_pad)))
        return eps[:rows, :cols]

    w0, b0 = _noisy_wb(w0_ref, sw0_ref, b0_ref, sb0_ref, draw_eps(w0_ref))
    w1, b1 = _noisy_wb(w1_ref, sw1_ref, b1_ref, sb1_ref, draw_eps(w1_ref))
    w2, b2 = _noisy_wb(w2_ref, sw2_ref, b2_ref, sb2_ref, draw_eps(w2_ref))
    _qnet_compute(x_ref, q_ref, w0, b0, w1, b1, w2, b2)


def _qnet_kernel_noisy_bits(x_ref, e0_ref, e1_ref, e2_ref,
                            w0_ref, sw0_ref, b0_ref, sb0_ref,
                            w1_ref, sw1_ref, b1_ref, sb1_ref,
                            w2_ref, sw2_ref, b2_ref, sb2_ref,
                            q_ref):
    """Portable path (CPU / interpret): raw uint32 bits are kernel inputs."""
    w0, b0 = _noisy_wb(w0_ref, sw0_ref, b0_ref, sb0_ref,
                       _std_normal_from_bits(e0_ref[...]))
    w1, b1 = _noisy_wb(w1_ref, sw1_ref, b1_ref, sb1_ref,
                       _std_normal_from_bits(e1_ref[...]))
    w2, b2 = _noisy_wb(w2_ref, sw2_ref, b2_ref, sb2_ref,
                       _std_normal_from_bits(e2_ref[...]))
    _qnet_compute(x_ref, q_ref, w0, b0, w1, b1, w2, b2)


# ---------------------------------------------------------------------------
# Wrapper.  `noise` is a Python-static flag (static specialization).
# ---------------------------------------------------------------------------
def qnetwork_forward(state, params, *, seed=0, noise=True):
    """state: (B, state_size) f32.  params: fused bf16 parameter dict (see builder).

    NoisyNet expects fresh noise per forward: pass a fresh `seed` each call.
    """
    B, S = state.shape
    out_dim = params["w2"].shape[1]          # 1 + action_size
    action_size = out_dim - 1

    vmem = pl.BlockSpec(memory_space=pltpu.MemorySpace.VMEM)
    smem = pl.BlockSpec(memory_space=pltpu.MemorySpace.SMEM)
    out_shape = jax.ShapeDtypeStruct((B, action_size), jnp.float32)

    mm_flops = 2 * B * (S * 256 + 256 * 256 + 256 * out_dim)
    param_bytes = sum(int(v.size) * v.dtype.itemsize for v in params.values())
    io_bytes = 4 * (B * S + B * action_size)

    clean_args = (params["w0"], params["b0"], params["w1"], params["b1"],
                  params["w2"], params["b2"])
    noisy_args = (params["w0"], params["sw0"], params["b0"], params["sb0"],
                  params["w1"], params["sw1"], params["b1"], params["sb1"],
                  params["w2"], params["sw2"], params["b2"], params["sb2"])

    if not noise:
        cost = pl.CostEstimate(flops=mm_flops, transcendentals=0,
                               bytes_accessed=param_bytes // 2 + io_bytes)
        return pl.pallas_call(
            _qnet_kernel_clean, out_shape=out_shape,
            in_specs=[vmem] * 7, out_specs=vmem, cost_estimate=cost,
        )(state, *clean_args)

    # One eps per (weight + bias) element, per layer.
    n_eps = (S + 1) * 256 + 257 * 256 + 257 * out_dim
    cost = pl.CostEstimate(
        flops=mm_flops + 15 * n_eps,          # eps polynomial / bit-twiddle VPU work
        transcendentals=3 * n_eps,            # log + sqrt + reciprocal per eps
        bytes_accessed=param_bytes + io_bytes + 8)

    if ON_TPU:
        seed_arr = jnp.array([seed], dtype=jnp.int32)
        return pl.pallas_call(
            _qnet_kernel_noisy_prng, out_shape=out_shape,
            in_specs=[smem] + [vmem] * 13, out_specs=vmem, cost_estimate=cost,
        )(seed_arr, state, *noisy_args)

    # Fallback (no TPU backend, e.g. interpret mode): identical in-kernel sampler,
    # fed with host-generated uint32 bits.
    key = jax.random.key(seed)
    k0, k1, k2 = jax.random.split(key, 3)
    e0 = jax.random.bits(k0, (S + 1, 256), jnp.uint32)
    e1 = jax.random.bits(k1, (257, 256), jnp.uint32)
    e2 = jax.random.bits(k2, (257, out_dim), jnp.uint32)
    return pl.pallas_call(
        _qnet_kernel_noisy_bits, out_shape=out_shape,
        in_specs=[vmem] * 16, out_specs=vmem, cost_estimate=cost,
    )(state, e0, e1, e2, *noisy_args)


# ---------------------------------------------------------------------------
# Parameter construction (mirrors NoisyLinear.reset_parameters), plus fusion of
# the branch / head layers into the kernel's 3-matmul layout.
# ---------------------------------------------------------------------------
def _init_noisy_linear(key, in_features, out_features, initial_sigma=INIT_SIGMA):
    bound = math.sqrt(3.0 / in_features)
    kw, kb = jax.random.split(key)
    w = jax.random.uniform(kw, (in_features, out_features), jnp.float32, -bound, bound)
    b = jax.random.uniform(kb, (out_features,), jnp.float32, -bound, bound)
    sw = jnp.full((in_features, out_features), initial_sigma, jnp.float32)
    sb = jnp.full((out_features,), initial_sigma, jnp.float32)
    cast = lambda a: a.astype(PARAM_DTYPE)
    return cast(w), cast(b), cast(sw), cast(sb)


def build_qnetwork_params(key, state_size, action_size, initial_sigma=INIT_SIGMA):
    k0, k1s, k1a, k2s, k2a = jax.random.split(key, 5)
    w0, b0, sw0, sb0 = _init_noisy_linear(k0, state_size, 256, initial_sigma)
    w1s, b1s, sw1s, sb1s = _init_noisy_linear(k1s, 256, 128, initial_sigma)
    w1a, b1a, sw1a, sb1a = _init_noisy_linear(k1a, 256, 128, initial_sigma)
    w2s, b2s, sw2s, sb2s = _init_noisy_linear(k2s, 128, 1, initial_sigma)
    w2a, b2a, sw2a, sb2a = _init_noisy_linear(k2a, 128, action_size, initial_sigma)

    # fc1_s / fc1_a fused along the output dim -> one (256, 256) matmul.
    w1 = jnp.concatenate([w1s, w1a], axis=1)
    sw1 = jnp.concatenate([sw1s, sw1a], axis=1)
    b1 = jnp.concatenate([b1s, b1a])
    sb1 = jnp.concatenate([sb1s, sb1a])

    # fc2_s / fc2_a fused as a block-diagonal (256, 1+A) matmul on [hs | ha].
    out_dim = 1 + action_size
    w2 = jnp.zeros((256, out_dim), PARAM_DTYPE)
    w2 = w2.at[:128, :1].set(w2s).at[128:, 1:].set(w2a)
    sw2 = jnp.zeros((256, out_dim), PARAM_DTYPE)     # zero sigma off-block: no cross-noise
    sw2 = sw2.at[:128, :1].set(sw2s).at[128:, 1:].set(sw2a)
    b2 = jnp.concatenate([b2s, b2a])
    sb2 = jnp.concatenate([sb2s, sb2a])

    fused = {
        "w0": w0, "sw0": sw0, "b0": b0.reshape(1, -1), "sb0": sb0.reshape(1, -1),
        "w1": w1, "sw1": sw1, "b1": b1.reshape(1, -1), "sb1": sb1.reshape(1, -1),
        "w2": w2, "sw2": sw2, "b2": b2.reshape(1, -1), "sb2": sb2.reshape(1, -1),
    }
    unfused = {
        "w0": w0, "b0": b0,
        "w1s": w1s, "b1s": b1s, "w1a": w1a, "b1a": b1a,
        "w2s": w2s, "b2s": b2s, "w2a": w2a, "b2a": b2a,
    }
    return fused, unfused


# ---------------------------------------------------------------------------
# Plain-JAX reference of the ORIGINAL (unfused) architecture, noise disabled.
# ---------------------------------------------------------------------------
def qnetwork_reference(x, p):
    f = lambda a: a.astype(jnp.float32)
    h0 = jnp.maximum(x @ f(p["w0"]) + f(p["b0"]), 0.0)
    hs = jnp.maximum(h0 @ f(p["w1s"]) + f(p["b1s"]), 0.0)
    sv = hs @ f(p["w2s"]) + f(p["b2s"])
    ha = jnp.maximum(h0 @ f(p["w1a"]) + f(p["b1a"]), 0.0)
    adv = ha @ f(p["w2a"]) + f(p["b2a"])
    return sv + adv - adv.mean(axis=1, keepdims=True)


if __name__ == "__main__":
    batch = 8
    state_size = 32
    action_size = 4

    key = jax.random.PRNGKey(0)
    k_params, k_state = jax.random.split(key)
    fused_params, unfused_params = build_qnetwork_params(k_params, state_size, action_size)
    state = jax.random.normal(k_state, (batch, state_size), jnp.float32)

    # 1) Noise disabled: fused kernel must reproduce the original architecture.
    #    Tolerance accounts for bf16 MXU inputs (f32 accumulation) vs f32 reference.
    q_clean = jax.block_until_ready(qnetwork_forward(state, fused_params, noise=False))
    q_ref = qnetwork_reference(state, unfused_params)
    assert q_clean.shape == (batch, action_size)
    assert jnp.allclose(q_clean, q_ref, atol=2e-2, rtol=2e-2), (
        "mismatch vs reference: max abs diff = "
        f"{float(jnp.max(jnp.abs(q_clean - q_ref)))}")

    # 2) Noise enabled (module default): W_eff = W + 0.017 * eps, eps ~ N(0,1).
    q_noisy = jax.block_until_ready(qnetwork_forward(state, fused_params, seed=123, noise=True))
    assert q_noisy.shape == (batch, action_size)
    assert bool(jnp.all(jnp.isfinite(q_noisy))), "non-finite Q values with noise"
    max_diff = float(jnp.max(jnp.abs(q_noisy - q_clean)))
    assert max_diff > 1e-6, "noise path had no effect"
    assert max_diff < 5.0, "noise magnitude implausibly large"

    # 3) Fresh seed -> fresh noise (caller supplies a new seed per forward).
    q_noisy2 = jax.block_until_ready(qnetwork_forward(state, fused_params, seed=321, noise=True))
    assert float(jnp.max(jnp.abs(q_noisy2 - q_noisy))) > 1e-6, "seed had no effect"

    print("KERNEL_OK")
</pallas_src>

<mosaic_0001>
module attributes {stable_mosaic.version = 11 : i64} {
  func.func @_qnet_kernel_clean(%arg0: memref<8x32xf32, #tpu.memory_space<vmem>>, %arg1: memref<32x256xbf16, #tpu.memory_space<vmem>>, %arg2: memref<1x256xbf16, #tpu.memory_space<vmem>>, %arg3: memref<256x256xbf16, #tpu.memory_space<vmem>>, %arg4: memref<1x256xbf16, #tpu.memory_space<vmem>>, %arg5: memref<256x5xbf16, #tpu.memory_space<vmem>>, %arg6: memref<1x5xbf16, #tpu.memory_space<vmem>>, %arg7: memref<8x4xf32, #tpu.memory_space<vmem>>) attributes {dimension_semantics = [], scalar_prefetch = 0 : i64, scratch_operands = 0 : i64, tpu.core_type = #tpu.core_type<tc>} {
    %c0 = arith.constant 0 : index
    %c0_0 = arith.constant 0 : index
    %0 = vector.load %arg1[%c0, %c0_0] : memref<32x256xbf16, #tpu.memory_space<vmem>>, vector<32x256xbf16>
    %c0_1 = arith.constant 0 : index
    %c0_2 = arith.constant 0 : index
    %1 = vector.load %arg2[%c0_1, %c0_2] : memref<1x256xbf16, #tpu.memory_space<vmem>>, vector<1x256xbf16>
    %2 = arith.extf %1 : vector<1x256xbf16> to vector<1x256xf32>
    %c0_3 = arith.constant 0 : index
    %c0_4 = arith.constant 0 : index
    %3 = vector.load %arg3[%c0_3, %c0_4] : memref<256x256xbf16, #tpu.memory_space<vmem>>, vector<256x256xbf16>
    %c0_5 = arith.constant 0 : index
    %c0_6 = arith.constant 0 : index
    %4 = vector.load %arg4[%c0_5, %c0_6] : memref<1x256xbf16, #tpu.memory_space<vmem>>, vector<1x256xbf16>
    %5 = arith.extf %4 : vector<1x256xbf16> to vector<1x256xf32>
    %c0_7 = arith.constant 0 : index
    %c0_8 = arith.constant 0 : index
    %6 = vector.load %arg5[%c0_7, %c0_8] : memref<256x5xbf16, #tpu.memory_space<vmem>>, vector<256x5xbf16>
    %c0_9 = arith.constant 0 : index
    %c0_10 = arith.constant 0 : index
    %7 = vector.load %arg6[%c0_9, %c0_10] : memref<1x5xbf16, #tpu.memory_space<vmem>>, vector<1x5xbf16>
    %8 = arith.extf %7 : vector<1x5xbf16> to vector<1x5xf32>
    %c0_11 = arith.constant 0 : index
    %c0_12 = arith.constant 0 : index
    %9 = vector.load %arg0[%c0_11, %c0_12] : memref<8x32xf32, #tpu.memory_space<vmem>>, vector<8x32xf32>
    %10 = arith.truncf %9 : vector<8x32xf32> to vector<8x32xbf16>
    %cst = arith.constant dense<0.000000e+00> : vector<8x256xf32>
    %11 = tpu.matmul %10, %0, %cst {dimension_numbers = #tpu.dot_dimension_numbers<[1], [0], [0], [1], [0, 0, 1, 1], [], []>} : vector<8x32xbf16>, vector<32x256xbf16>, vector<8x256xf32> -> vector<8x256xf32>
    %12 = vector.broadcast %2 : vector<1x256xf32> to vector<8x256xf32>
    %13 = arith.addf %11, %12 : vector<8x256xf32>
    %cst_13 = arith.constant 0.000000e+00 : f32
    %14 = vector.broadcast %cst_13 : f32 to vector<8x256xf32>
    %15 = arith.maximumf %13, %14 : vector<8x256xf32>
    %16 = arith.truncf %15 : vector<8x256xf32> to vector<8x256xbf16>
    %cst_14 = arith.constant dense<0.000000e+00> : vector<8x256xf32>
    %17 = tpu.matmul %16, %3, %cst_14 {dimension_numbers = #tpu.dot_dimension_numbers<[1], [0], [0], [1], [0, 0, 1, 1], [], []>} : vector<8x256xbf16>, vector<256x256xbf16>, vector<8x256xf32> -> vector<8x256xf32>
    %18 = vector.broadcast %5 : vector<1x256xf32> to vector<8x256xf32>
    %19 = arith.addf %17, %18 : vector<8x256xf32>
    %cst_15 = arith.constant 0.000000e+00 : f32
    %20 = vector.broadcast %cst_15 : f32 to vector<8x256xf32>
    %21 = arith.maximumf %19, %20 : vector<8x256xf32>
    %22 = arith.truncf %21 : vector<8x256xf32> to vector<8x256xbf16>
    %cst_16 = arith.constant dense<0.000000e+00> : vector<8x5xf32>
    %23 = tpu.matmul %22, %6, %cst_16 {dimension_numbers = #tpu.dot_dimension_numbers<[1], [0], [0], [1], [0, 0, 1, 1], [], []>} : vector<8x256xbf16>, vector<256x5xbf16>, vector<8x5xf32> -> vector<8x5xf32>
    %24 = vector.broadcast %8 : vector<1x5xf32> to vector<8x5xf32>
    %25 = arith.addf %23, %24 : vector<8x5xf32>
    %26 = vector.extract_strided_slice %25 {offsets = [0, 0], sizes = [8, 1], strides = [1, 1]} : vector<8x5xf32> to vector<8x1xf32>
    %27 = vector.extract_strided_slice %25 {offsets = [0, 1], sizes = [8, 4], strides = [1, 1]} : vector<8x5xf32> to vector<8x4xf32>
    %28 = vector.broadcast %26 : vector<8x1xf32> to vector<8x4xf32>
    %29 = arith.addf %28, %27 : vector<8x4xf32>
    %cst_17 = arith.constant dense<0.000000e+00> : vector<8xf32>
    %30 = vector.multi_reduction <add>, %27, %cst_17 [1] : vector<8x4xf32> to vector<8xf32>
    %31 = vector.shape_cast %30 : vector<8xf32> to vector<8x1xf32>
    %cst_18 = arith.constant 4.000000e+00 : f32
    %32 = vector.broadcast %cst_18 : f32 to vector<8x1xf32>
    %33 = arith.divf %31, %32 : vector<8x1xf32>
    %34 = vector.broadcast %33 : vector<8x1xf32> to vector<8x4xf32>
    %35 = arith.subf %29, %34 : vector<8x4xf32>
    %c0_19 = arith.constant 0 : index
    %c0_20 = arith.constant 0 : index
    %36 = vector.load %arg7[%c0_19, %c0_20] : memref<8x4xf32, #tpu.memory_space<vmem>>, vector<8x4xf32>
    tpu.vector_store %arg7[%c0_19, %c0_20], %35 {strides = array<i32>} : memref<8x4xf32, #tpu.memory_space<vmem>>, vector<8x4xf32>,
    return
  }
}

</mosaic_0001>

<llo_original>
// kernel: tpu_custom_call.1
$region0: #{tpu_custom_call.1}
  #allocation0 [shape = 'u32[]', space=smem, size = 0x4, offset = 0x4, fixed_abs, tag = 'smem constant byte address 0x4 - core index']
  #allocation1 [shape = 'u32[144,128]{1,0:T(1,128)}', space=vmem, size = 0x12000, scoped, tag = 'internal scratch']
  %s0 = inlined_call_operand.vmem [shape: f32[8,32], index: 0, kind: input, shape index: {}]
  %s1 = inlined_call_operand.vmem [shape: bf16[32,256], index: 1, kind: input, shape index: {}]
  %s2 = inlined_call_operand.vmem [shape: bf16[1,256], index: 2, kind: input, shape index: {}]
  %s3 = inlined_call_operand.hbm [shape: bf16[256,256], index: 3, kind: input, shape index: {}]
  %s4 = inlined_call_operand.vmem [shape: bf16[1,256], index: 4, kind: input, shape index: {}]
  %s5 = inlined_call_operand.vmem [shape: bf16[256,5], index: 5, kind: input, shape index: {}]
  %s6 = inlined_call_operand.vmem [shape: bf16[1,5], index: 6, kind: input, shape index: {}]
  %s7 = inlined_call_operand.vmem [shape: f32[8,4], index: 7, kind: output, shape index: {}]
  %s8 = sld [smem:[#allocation0]]
  $region42: #{tpu_custom_call.1} parent=0
    _
  %s10 = ssub.s32 1, %s8
  %s11 = scalar_select 0, %s10, %s8
  $region1: #{tpu_custom_call.1} parent=0
    #allocation2 [shape = 'u8[131072]{0}', space=vmem, size = 0x20000, scoped, tag = 'input window, operand 3, single buffered']
    #allocation3 [shape = 's32[1]{0}', space=sflag, size = 0x4, scoped, tag = 'scoped memory for tpu_custom_call.1']
    %12 = vsyncpa [#allocation3], 0
    // Predicated region
    $region2: #{tpu_custom_call.1} parent=1 // pred_check
      _
    $region3: #{tpu_custom_call.1} parent=1 // pred_check_branch
      %14 = sbr.rel (0) target = $region5
    $region4: #{tpu_custom_call.1} parent=1 // pred_region
      _
    $region5: #{tpu_custom_call.1} parent=1 // pred_fallthru
      _
    // Predicated region
    $region6: #{tpu_custom_call.1} parent=1 // pred_check
      _
    $region7: #{tpu_custom_call.1} parent=1 // pred_check_branch
      %16 = sbr.rel (0) target = $region9
    $region8: #{tpu_custom_call.1} parent=1 // pred_region
      _
    $region9: #{tpu_custom_call.1} parent=1 // pred_fallthru
      _
    // Predicated region
    $region10: #{tpu_custom_call.1} parent=1 // pred_check
      _
    $region11: #{tpu_custom_call.1} parent=1 // pred_check_branch
      %18 = sbr.rel (0) target = $region13
    $region12: #{tpu_custom_call.1} parent=1 // pred_region
      _
    $region13: #{tpu_custom_call.1} parent=1 // pred_fallthru
      _
    // Predicated region
    $region14: #{tpu_custom_call.1} parent=1 // pred_check
      _
    $region15: #{tpu_custom_call.1} parent=1 // pred_check_branch
      %20 = sbr.rel (0) target = $region17
    $region16: #{tpu_custom_call.1} parent=1 // pred_region
      %s22 = ssub.s32 4096, 4096
      %23 = vsyncadd [#allocation3], %s22
      %s24 = sshll.u32 [#allocation2], 4
      %s25 = int_to_ptr.vmem [resolvable:$true] %s24
      %30 = dma.hbm_to_vmem [thread:$0]  %s3, 4096, %s25, [#allocation3], 128, 128, 8
    $region17: #{tpu_custom_call.1} parent=1 // pred_fallthru
      _
    // Predicated region
    $region18: #{tpu_custom_call.1} parent=1 // pred_check
      _
    $region19: #{tpu_custom_call.1} parent=1 // pred_check_branch
      %32 = sbr.rel (0) target = $region21
    $region20: #{tpu_custom_call.1} parent=1 // pred_region
      _
    $region21: #{tpu_custom_call.1} parent=1 // pred_fallthru
      _
    // Predicated region
    $region22: #{tpu_custom_call.1} parent=1 // pred_check
      _
    $region23: #{tpu_custom_call.1} parent=1 // pred_check_branch
      %34 = sbr.rel (0) target = $region25
    $region24: #{tpu_custom_call.1} parent=1 // pred_region
      _
    $region25: #{tpu_custom_call.1} parent=1 // pred_fallthru
      _
    // Predicated region
    $region26: #{tpu_custom_call.1} parent=1 // pred_check
      _
    $region27: #{tpu_custom_call.1} parent=1 // pred_check_branch
      %36 = sbr.rel (0) target = $region29
    $region28: #{tpu_custom_call.1} parent=1 // pred_region
      _
    $region29: #{tpu_custom_call.1} parent=1 // pred_fallthru
      _
    // Predicated region
    $region30: #{tpu_custom_call.1} parent=1 // pred_check
      _
    $region31: #{tpu_custom_call.1} parent=1 // pred_check_branch
      %38 = sbr.rel (0) target = $region33
    $region32: #{tpu_custom_call.1} parent=1 // pred_region
      %39 = dma.done [#allocation3], 4096
    $region33: #{tpu_custom_call.1} parent=1 // pred_fallthru
      _
    %v41 = vld [vmem:[%s1] sm:$0xff]
    %v42 = vld [vmem:[%s1 + $0x8] sm:$0xff]
    %v43 = vld [vmem:[%s1 + $0x10] sm:$0xff]
    %v44 = vld [vmem:[%s1 + $0x18] sm:$0xff]
    %v45 = vld [vmem:[%s2] sm:$0x3]
    %v46 = vunpack.c.l.bf16 %v45
    %v47 = vld [vmem:[#allocation2] sm:$0xff]
    %v48 = vld [vmem:[#allocation2 + $0x8] sm:$0xff]
    %v49 = vld [vmem:[#allocation2 + $0x10] sm:$0xff]
    %v50 = vld [vmem:[#allocation2 + $0x18] sm:$0xff]
    %v51 = vld [vmem:[#allocation2 + $0x20] sm:$0xff]
    %v52 = vld [vmem:[#allocation2 + $0x28] sm:$0xff]
    %v53 = vld [vmem:[#allocation2 + $0x30] sm:$0xff]
    %v54 = vld [vmem:[#allocation2 + $0x38] sm:$0xff]
    %v55 = vld [vmem:[#allocation2 + $0x40] sm:$0xff]
    %v56 = vld [vmem:[#allocation2 + $0x48] sm:$0xff]
    %v57 = vld [vmem:[#allocation2 + $0x50] sm:$0xff]
    %v58 = vld [vmem:[#allocation2 + $0x58] sm:$0xff]
    %v59 = vld [vmem:[#allocation2 + $0x60] sm:$0xff]
    %v60 = vld [vmem:[#allocation2 + $0x68] sm:$0xff]
    %v61 = vld [vmem:[#allocation2 + $0x70] sm:$0xff]
    %v62 = vld [vmem:[#allocation2 + $0x78] sm:$0xff]
    %v63 = vld [vmem:[#allocation2 + $0x80] sm:$0xff]
    %v64 = vld [vmem:[#allocation2 + $0x88] sm:$0xff]
    %v65 = vld [vmem:[#allocation2 + $0x90] sm:$0xff]
    %v66 = vld [vmem:[#allocation2 + $0x98] sm:$0xff]
    %v67 = vld [vmem:[#allocation2 + $0xa0] sm:$0xff]
    %v68 = vld [vmem:[#allocation2 + $0xa8] sm:$0xff]
    %v69 = vld [vmem:[#allocation2 + $0xb0] sm:$0xff]
    %v70 = vld [vmem:[#allocation2 + $0xb8] sm:$0xff]
    %v71 = vld [vmem:[#allocation2 + $0xc0] sm:$0xff]
    %v72 = vld [vmem:[#allocation2 + $0xc8] sm:$0xff]
    %v73 = vld [vmem:[#allocation2 + $0xd0] sm:$0xff]
    %v74 = vld [vmem:[#allocation2 + $0xd8] sm:$0xff]
    %v75 = vld [vmem:[#allocation2 + $0xe0] sm:$0xff]
    %v76 = vld [vmem:[#allocation2 + $0xe8] sm:$0xff]
    %v77 = vld [vmem:[#allocation2 + $0xf0] sm:$0xff]
    %v78 = vld [vmem:[#allocation2 + $0xf8] sm:$0xff]
    %v79 = vld [vmem:[%s4] sm:$0x3]
    %v80 = vunpack.c.l.bf16 %v79
    %v81 = vld [vmem:[%s5] sm:$0xf]
    %v82 = vld [vmem:[%s5 + $0x4] sm:$0xf]
    %v83 = vld [vmem:[%s5 + $0x8] sm:$0xf]
    %v84 = vld [vmem:[%s5 + $0xc] sm:$0xf]
    %v85 = vld [vmem:[%s5 + $0x10] sm:$0xf]
    %v86 = vld [vmem:[%s5 + $0x14] sm:$0xf]
    %v87 = vld [vmem:[%s5 + $0x18] sm:$0xf]
    %v88 = vld [vmem:[%s5 + $0x1c] sm:$0xf]
    %v89 = vld [vmem:[%s5 + $0x20] sm:$0xf]
    %v90 = vld [vmem:[%s5 + $0x24] sm:$0xf]
    %v91 = vld [vmem:[%s5 + $0x28] sm:$0xf]
    %v92 = vld [vmem:[%s5 + $0x2c] sm:$0xf]
    %v93 = vld [vmem:[%s5 + $0x30] sm:$0xf]
    %v94 = vld [vmem:[%s5 + $0x34] sm:$0xf]
    %v95 = vld [vmem:[%s5 + $0x38] sm:$0xf]
    %v96 = vld [vmem:[%s5 + $0x3c] sm:$0xf]
    %v97 = vld [vmem:[%s5 + $0x40] sm:$0xf]
    %v98 = vld [vmem:[%s5 + $0x44] sm:$0xf]
    %v99 = vld [vmem:[%s5 + $0x48] sm:$0xf]
    %v100 = vld [vmem:[%s5 + $0x4c] sm:$0xf]
    %v101 = vld [vmem:[%s5 + $0x50] sm:$0xf]
    %v102 = vld [vmem:[%s5 + $0x54] sm:$0xf]
    %v103 = vld [vmem:[%s5 + $0x58] sm:$0xf]
    %v104 = vld [vmem:[%s5 + $0x5c] sm:$0xf]
    %v105 = vld [vmem:[%s5 + $0x60] sm:$0xf]
    %v106 = vld [vmem:[%s5 + $0x64] sm:$0xf]
    %v107 = vld [vmem:[%s5 + $0x68] sm:$0xf]
    %v108 = vld [vmem:[%s5 + $0x6c] sm:$0xf]
    %v109 = vld [vmem:[%s5 + $0x70] sm:$0xf]
    %v110 = vld [vmem:[%s5 + $0x74] sm:$0xf]
    %v111 = vld [vmem:[%s5 + $0x78] sm:$0xf]
    %v112 = vld [vmem:[%s5 + $0x7c] sm:$0xf]
    %v113 = vld [vmem:[%s6] sm:$0x1]
    %v114 = vunpack.c.l.bf16 %v113
    %v115 = vld [vmem:[%s0] sm:$0xff]
    %v116 = vpack.c.bf16 %v115, %v115
    %v118 = vlaneseq
    %v119 = vshrl.u32 %v118, 7
    %v120 = vsub.s32 0, %v119
    %v121 = vrot.slane %v46, %v120
    %v122 = vlaneseq
    %v123 = vshrl.u32 %v122, 7
    %v124 = vsub.s32 2, %v123
    %v125 = vrot.slane %v46, %v124
    %v128 = vlaneseq
    %v129 = vshrl.u32 %v128, 7
    %v130 = vsub.s32 0, %v129
    %v131 = vrot.slane %v121, %v130
    %v132 = vlaneseq
    %v133 = vshrl.u32 %v132, 7
    %v134 = vsub.s32 0, %v133
    %v135 = vrot.slane %v125, %v134
    %v140 = vunpack.c.l.b16 %v41
    %v141 = vunpack.c.h.b16 %v41
    %v142 = vunpack.c.l.b16 %v42
    %v143 = vunpack.c.h.b16 %v42
    %v144 = vunpack.c.l.b16 %v43
    %v145 = vunpack.c.h.b16 %v43
    %v146 = vunpack.c.l.b16 %v44
    %v147 = vunpack.c.h.b16 %v44
    %v148 = vpack.c.b16 %v142, %v140
    %v149 = vpack.c.b16 %v143, %v141
    %v150 = vpack.c.b16 %v146, %v144
    %v151 = vpack.c.b16 %v147, %v145
    %vm156 = vcmask 261120
    %v158 = vsel %vm156, %v116, 0
    %160 = vmatprep.subr.bf16.mxu0 0
    %161 = vmatpush1.bf16.msra.mxu0 0
    %162 = vmatprep.subr.bf16.mxu0 0
    %163 = vmatpush1.bf16.msra.mxu0 0
    %164 = vmatprep.subr.bf16.mxu0 0
    %165 = vmatpush1.bf16.msra.mxu0 0
    %166 = vmatprep.subr.bf16.mxu0 0
    %167 = vmatpush1.bf16.msra.mxu0 0
    %168 = vmatprep.subr.bf16.mxu0 0
    %169 = vmatpush1.bf16.msra.mxu0 0
    %170 = vmatprep.subr.bf16.mxu0 0
    %171 = vmatpush1.bf16.msra.mxu0 0
    %172 = vmatprep.subr.bf16.mxu0 %v151
    %173 = vmatpush1.bf16.msra.mxu0 %v150
    %174 = vmatprep.subr.bf16.mxu0 %v149
    %175 = vmatpush1.bf16.msra.mxu0 %v148
    %176 = vmatprep.subr.bf16.mxu0 0
    %177 = vmatpush2.bf16.msra.mxu0 0
    %178 = vmatprep.subr.bf16.mxu0 0
    %179 = vmatpush2.bf16.msra.mxu0 0
    %180 = vmatprep.subr.bf16.mxu0 0
    %181 = vmatpush2.bf16.msra.mxu0 0
    %182 = vmatprep.subr.bf16.mxu0 0
    %183 = vmatpush2.bf16.msra.mxu0 0
    %184 = vmatprep.subr.bf16.mxu0 0
    %185 = vmatpush2.bf16.msra.mxu0 0
    %186 = vmatprep.subr.bf16.mxu0 0
    %187 = vmatpush2.bf16.msra.mxu0 0
    %188 = vmatprep.subr.bf16.mxu0 0
    %189 = vmatpush2.bf16.msra.mxu0 0
    %190 = vmatprep.subr.bf16.mxu0 0
    %191 = vmatpush2.bf16.msra.mxu0 0
    %192 = vmatprep.mubr.bf16.mxu0 0
    %193 = vmatmul.mubr.bf16.gmra.mxu0 %v158
    %v194 = vpop.f32.mrf.mxu0
    %v195 = vadd.f32 %v131, %v194
    %v196 = vpop.f32.mrf.mxu0
    %v197 = vadd.f32 %v135, %v196
    %v198 = vpop.f32.mrf.mxu0
    %v199 = vpop.f32.mrf.mxu0
    %200 = vdwg.mxu0
    %v201 = vmax.f32 %v195, 0.0
    %v202 = vmax.f32 %v197, 0.0
    %v203 = vpack.c.bf16 %v201, %v201
    %v204 = vpack.c.bf16 %v202, %v202
    %v206 = vlaneseq
    %v207 = vshrl.u32 %v206, 7
    %v208 = vsub.s32 0, %v207
    %v209 = vrot.slane %v80, %v208
    %v210 = vlaneseq
    %v211 = vshrl.u32 %v210, 7
    %v212 = vsub.s32 2, %v211
    %v213 = vrot.slane %v80, %v212
    %v216 = vlaneseq
    %v217 = vshrl.u32 %v216, 7
    %v218 = vsub.s32 0, %v217
    %v219 = vrot.slane %v209, %v218
    %v220 = vlaneseq
    %v221 = vshrl.u32 %v220, 7
    %v222 = vsub.s32 0, %v221
    %v223 = vrot.slane %v213, %v222
    %v256 = vunpack.c.l.b16 %v47
    %v257 = vunpack.c.h.b16 %v47
    %v258 = vunpack.c.l.b16 %v48
    %v259 = vunpack.c.h.b16 %v48
    %v260 = vunpack.c.l.b16 %v49
    %v261 = vunpack.c.h.b16 %v49
    %v262 = vunpack.c.l.b16 %v50
    %v263 = vunpack.c.h.b16 %v50
    %v264 = vunpack.c.l.b16 %v51
    %v265 = vunpack.c.h.b16 %v51
    %v266 = vunpack.c.l.b16 %v52
    %v267 = vunpack.c.h.b16 %v52
    %v268 = vunpack.c.l.b16 %v53
    %v269 = vunpack.c.h.b16 %v53
    %v270 = vunpack.c.l.b16 %v54
    %v271 = vunpack.c.h.b16 %v54
    %v272 = vunpack.c.l.b16 %v55
    %v273 = vunpack.c.h.b16 %v55
    %v274 = vunpack.c.l.b16 %v56
    %v275 = vunpack.c.h.b16 %v56
    %v276 = vunpack.c.l.b16 %v57
    %v277 = vunpack.c.h.b16 %v57
    %v278 = vunpack.c.l.b16 %v58
    %v279 = vunpack.c.h.b16 %v58
    %v280 = vunpack.c.l.b16 %v59
    %v281 = vunpack.c.h.b16 %v59
    %v282 = vunpack.c.l.b16 %v60
    %v283 = vunpack.c.h.b16 %v60
    %v284 = vunpack.c.l.b16 %v61
    %v285 = vunpack.c.h.b16 %v61
    %v286 = vunpack.c.l.b16 %v62
    %v287 = vunpack.c.h.b16 %v62
    %v288 = vunpack.c.l.b16 %v63
    %v289 = vunpack.c.h.b16 %v63
    %v290 = vunpack.c.l.b16 %v64
    %v291 = vunpack.c.h.b16 %v64
    %v292 = vunpack.c.l.b16 %v65
    %v293 = vunpack.c.h.b16 %v65
    %v294 = vunpack.c.l.b16 %v66
    %v295 = vunpack.c.h.b16 %v66
    %v296 = vunpack.c.l.b16 %v67
    %v297 = vunpack.c.h.b16 %v67
    %v298 = vunpack.c.l.b16 %v68
    %v299 = vunpack.c.h.b16 %v68
    %v300 = vunpack.c.l.b16 %v69
    %v301 = vunpack.c.h.b16 %v69
    %v302 = vunpack.c.l.b16 %v70
    %v303 = vunpack.c.h.b16 %v70
    %v304 = vunpack.c.l.b16 %v71
    %v305 = vunpack.c.h.b16 %v71
    %v306 = vunpack.c.l.b16 %v72
    %v307 = vunpack.c.h.b16 %v72
    %v308 = vunpack.c.l.b16 %v73
    %v309 = vunpack.c.h.b16 %v73
    %v310 = vunpack.c.l.b16 %v74
    %v311 = vunpack.c.h.b16 %v74
    %v312 = vunpack.c.l.b16 %v75
    %v313 = vunpack.c.h.b16 %v75
    %v314 = vunpack.c.l.b16 %v76
    %v315 = vunpack.c.h.b16 %v76
    %v316 = vunpack.c.l.b16 %v77
    %v317 = vunpack.c.h.b16 %v77
    %v318 = vunpack.c.l.b16 %v78
    %v319 = vunpack.c.h.b16 %v78
    %v320 = vpack.c.b16 %v258, %v256
    %v321 = vpack.c.b16 %v259, %v257
    %v322 = vpack.c.b16 %v262, %v260
    %v323 = vpack.c.b16 %v263, %v261
    %v324 = vpack.c.b16 %v266, %v264
    %v325 = vpack.c.b16 %v267, %v265
    %v326 = vpack.c.b16 %v270, %v268
    %v327 = vpack.c.b16 %v271, %v269
    %v328 = vpack.c.b16 %v274, %v272
    %v329 = vpack.c.b16 %v275, %v273
    %v330 = vpack.c.b16 %v278, %v276
    %v331 = vpack.c.b16 %v279, %v277
    %v332 = vpack.c.b16 %v282, %v280
    %v333 = vpack.c.b16 %v283, %v281
    %v334 = vpack.c.b16 %v286, %v284
    %v335 = vpack.c.b16 %v287, %v285
    %v336 = vpack.c.b16 %v290, %v288
    %v337 = vpack.c.b16 %v291, %v289
    %v338 = vpack.c.b16 %v294, %v292
    %v339 = vpack.c.b16 %v295, %v293
    %v340 = vpack.c.b16 %v298, %v296
    %v341 = vpack.c.b16 %v299, %v297
    %v342 = vpack.c.b16 %v302, %v300
    %v343 = vpack.c.b16 %v303, %v301
    %v344 = vpack.c.b16 %v306, %v304
    %v345 = vpack.c.b16 %v307, %v305
    %v346 = vpack.c.b16 %v310, %v308
    %v347 = vpack.c.b16 %v311, %v309
    %v348 = vpack.c.b16 %v314, %v312
    %v349 = vpack.c.b16 %v315, %v313
    %v350 = vpack.c.b16 %v318, %v316
    %v351 = vpack.c.b16 %v319, %v317
    %384 = vmatprep.subr.bf16.mxu0 %v335
    %385 = vmatpush1.bf16.msra.mxu0 %v334
    %386 = vmatprep.subr.bf16.mxu0 %v333
    %387 = vmatpush1.bf16.msra.mxu0 %v332
    %388 = vmatprep.subr.bf16.mxu0 %v331
    %389 = vmatpush1.bf16.msra.mxu0 %v330
    %390 = vmatprep.subr.bf16.mxu0 %v329
    %391 = vmatpush1.bf16.msra.mxu0 %v328
    %392 = vmatprep.subr.bf16.mxu0 %v327
    %393 = vmatpush1.bf16.msra.mxu0 %v326
    %394 = vmatprep.subr.bf16.mxu0 %v325
    %395 = vmatpush1.bf16.msra.mxu0 %v324
    %396 = vmatprep.subr.bf16.mxu0 %v323
    %397 = vmatpush1.bf16.msra.mxu0 %v322
    %398 = vmatprep.subr.bf16.mxu0 %v321
    %399 = vmatpush1.bf16.msra.mxu0 %v320
    %400 = vmatprep.subr.bf16.mxu0 %v351
    %401 = vmatpush2.bf16.msra.mxu0 %v350
    %402 = vmatprep.subr.bf16.mxu0 %v349
    %403 = vmatpush2.bf16.msra.mxu0 %v348
    %404 = vmatprep.subr.bf16.mxu0 %v347
    %405 = vmatpush2.bf16.msra.mxu0 %v346
    %406 = vmatprep.subr.bf16.mxu0 %v345
    %407 = vmatpush2.bf16.msra.mxu0 %v344
    %408 = vmatprep.subr.bf16.mxu0 %v343
    %409 = vmatpush2.bf16.msra.mxu0 %v342
    %410 = vmatprep.subr.bf16.mxu0 %v341
    %411 = vmatpush2.bf16.msra.mxu0 %v340
    %412 = vmatprep.subr.bf16.mxu0 %v339
    %413 = vmatpush2.bf16.msra.mxu0 %v338
    %414 = vmatprep.subr.bf16.mxu0 %v337
    %415 = vmatpush2.bf16.msra.mxu0 %v336
    %416 = vmatprep.mubr.bf16.mxu0 %v204
    %417 = vmatmul.mubr.bf16.gmra.mxu0 %v203
    %v418 = vpop.f32.mrf.mxu0
    %v419 = vadd.f32 %v219, %v418
    %v420 = vpop.f32.mrf.mxu0
    %v421 = vadd.f32 %v223, %v420
    %v422 = vpop.f32.mrf.mxu0
    %v423 = vpop.f32.mrf.mxu0
    %424 = vdwg.mxu0
    %v425 = vmax.f32 %v419, 0.0
    %v426 = vmax.f32 %v421, 0.0
    %v427 = vpack.c.bf16 %v425, %v425
    %v428 = vpack.c.bf16 %v426, %v426
    %v429 = vlaneseq
    %v430 = vshrl.u32 %v429, 7
    %v431 = vsub.s32 0, %v430
    %v432 = vrot.slane %v114, %v431
    %v465 = vunpack.c.l.b16 %v81
    %v466 = vunpack.c.l.b16 %v82
    %v467 = vunpack.c.l.b16 %v83
    %v468 = vunpack.c.l.b16 %v84
    %v469 = vunpack.c.l.b16 %v85
    %v470 = vunpack.c.l.b16 %v86
    %v471 = vunpack.c.l.b16 %v87
    %v472 = vunpack.c.l.b16 %v88
    %v473 = vunpack.c.l.b16 %v89
    %v474 = vunpack.c.l.b16 %v90
    %v475 = vunpack.c.l.b16 %v91
    %v476 = vunpack.c.l.b16 %v92
    %v477 = vunpack.c.l.b16 %v93
    %v478 = vunpack.c.l.b16 %v94
    %v479 = vunpack.c.l.b16 %v95
    %v480 = vunpack.c.l.b16 %v96
    %v481 = vunpack.c.l.b16 %v97
    %v482 = vunpack.c.l.b16 %v98
    %v483 = vunpack.c.l.b16 %v99
    %v484 = vunpack.c.l.b16 %v100
    %v485 = vunpack.c.l.b16 %v101
    %v486 = vunpack.c.l.b16 %v102
    %v487 = vunpack.c.l.b16 %v103
    %v488 = vunpack.c.l.b16 %v104
    %v489 = vunpack.c.l.b16 %v105
    %v490 = vunpack.c.l.b16 %v106
    %v491 = vunpack.c.l.b16 %v107
    %v492 = vunpack.c.l.b16 %v108
    %v493 = vunpack.c.l.b16 %v109
    %v494 = vunpack.c.l.b16 %v110
    %v495 = vunpack.c.l.b16 %v111
    %v496 = vunpack.c.l.b16 %v112
    %v497 = vpack.c.b16 %v466, %v465
    %v498 = vpack.c.b16 %v468, %v467
    %v499 = vpack.c.b16 %v470, %v469
    %v500 = vpack.c.b16 %v472, %v471
    %v501 = vpack.c.b16 %v474, %v473
    %v502 = vpack.c.b16 %v476, %v475
    %v503 = vpack.c.b16 %v478, %v477
    %v504 = vpack.c.b16 %v480, %v479
    %v505 = vpack.c.b16 %v482, %v481
    %v506 = vpack.c.b16 %v484, %v483
    %v507 = vpack.c.b16 %v486, %v485
    %v508 = vpack.c.b16 %v488, %v487
    %v509 = vpack.c.b16 %v490, %v489
    %v510 = vpack.c.b16 %v492, %v491
    %v511 = vpack.c.b16 %v494, %v493
    %v512 = vpack.c.b16 %v496, %v495
    %529 = vmatprep.subr.bf16.mxu0 0
    %530 = vmatpush1.bf16.msra.mxu0 %v504
    %531 = vmatprep.subr.bf16.mxu0 0
    %532 = vmatpush1.bf16.msra.mxu0 %v503
    %533 = vmatprep.subr.bf16.mxu0 0
    %534 = vmatpush1.bf16.msra.mxu0 %v502
    %535 = vmatprep.subr.bf16.mxu0 0
    %536 = vmatpush1.bf16.msra.mxu0 %v501
    %537 = vmatprep.subr.bf16.mxu0 0
    %538 = vmatpush1.bf16.msra.mxu0 %v500
    %539 = vmatprep.subr.bf16.mxu0 0
    %540 = vmatpush1.bf16.msra.mxu0 %v499
    %541 = vmatprep.subr.bf16.mxu0 0
    %542 = vmatpush1.bf16.msra.mxu0 %v498
    %543 = vmatprep.subr.bf16.mxu0 0
    %544 = vmatpush1.bf16.msra.mxu0 %v497
    %545 = vmatprep.subr.bf16.mxu0 0
    %546 = vmatpush2.bf16.msra.mxu0 %v512
    %547 = vmatprep.subr.bf16.mxu0 0
    %548 = vmatpush2.bf16.msra.mxu0 %v511
    %549 = vmatprep.subr.bf16.mxu0 0
    %550 = vmatpush2.bf16.msra.mxu0 %v510
    %551 = vmatprep.subr.bf16.mxu0 0
    %552 = vmatpush2.bf16.msra.mxu0 %v509
    %553 = vmatprep.subr.bf16.mxu0 0
    %554 = vmatpush2.bf16.msra.mxu0 %v508
    %555 = vmatprep.subr.bf16.mxu0 0
    %556 = vmatpush2.bf16.msra.mxu0 %v507
    %557 = vmatprep.subr.bf16.mxu0 0
    %558 = vmatpush2.bf16.msra.mxu0 %v506
    %559 = vmatprep.subr.bf16.mxu0 0
    %560 = vmatpush2.bf16.msra.mxu0 %v505
    %561 = vmatprep.mubr.bf16.mxu0 %v428
    %562 = vmatmul.mubr.bf16.gmra.mxu0 %v427
    %v563 = vpop.f32.mrf.mxu0
    %v564 = vadd.f32 %v432, %v563
    %v565 = vpop.f32.mrf.mxu0
    %v566 = vpop.f32.mrf.mxu0
    %v567 = vpop.f32.mrf.mxu0
    %568 = vdwg.mxu0
    %570 = vset.pattern.permute.xlu0 0
    %571 = vperm.xlu0 %570, %v564
    %v572 = vpop.permute.xlu0 %571
    %v574 = vadd.f32 %v572, %v564
    %575 = vrot.lane.b32.xlu0 %v564, 127
    %v576 = vpop.permute.xlu0 %575
    %vm578 = vcmask 31744
    %v579 = vsel %vm578, %v576, 0.0
    %580 = vadd.xlane.f32.xlu0 %v579
    %v581 = vpop.xlane.xlu0 %580
    %v582 = vrcp.pop 4.0
    %v583 = vmul.f32 %v581, %v582
    %v584 = vsub.f32 %v574, %v583
    %586 = vrot.lane.b32.xlu0 %v584, 127
    %v587 = vpop.permute.xlu0 %586
    %589 = vst.msk [vmem:[%s7] sm:$0xff] %vm578, %v587
    // Predicated region
    $region34: #{tpu_custom_call.1} parent=1 // pred_check
      _
    $region35: #{tpu_custom_call.1} parent=1 // pred_check_branch
      %591 = sbr.rel (0) target = $region37
    $region36: #{tpu_custom_call.1} parent=1 // pred_region
      _
    $region37: #{tpu_custom_call.1} parent=1 // pred_fallthru
      _
    // Predicated region
    $region38: #{tpu_custom_call.1} parent=1 // pred_check
      _
    $region39: #{tpu_custom_call.1} parent=1 // pred_check_branch
      %593 = sbr.rel (0) target = $region41
    $region40: #{tpu_custom_call.1} parent=1 // pred_region
      _
    $region41: #{tpu_custom_call.1} parent=1 // pred_fallthru
      _
    %594 = vsyncpa [#allocation3], 1

</llo_original>
